<compile_context>
chip_gen: v7x
topology: tpu7x:2x2x1
jax: 0.10.0
libtpu: 0.0.40
codegen_flags: <defaults>
</compile_context>

<pallas_src>
import jax
import jax.numpy as jnp
from jax import lax
from jax.experimental import pallas as pl
from jax.experimental.pallas import tpu as pltpu


_TILE_S_CAP = 2048  # one-block cap: a (2048, 256) f32 slab is ~2 MB, VMEM-safe on v5e/v6e/v7x


def _round_up(x, m):
    return (x + m - 1) // m * m


def _softplus(x):
    # Matches torch.nn.Softplus(beta=1, threshold=20):
    #   x                if x > 20
    #   log(1 + exp(x))  otherwise
    return jnp.where(x > 20.0, x, jnp.log1p(jnp.exp(jnp.minimum(x, 20.0))))


# ---------------------------------------------------------------------------
# Kernels
# ---------------------------------------------------------------------------

def _mlp3(x, w0_ref, w1_ref, w2_ref, b_ref, hp, nop):
    """3-layer MLP body: lin0 -> softplus -> lin1 -> softplus -> lin2."""
    h = jnp.dot(x, w0_ref[...], preferred_element_type=jnp.float32)
    h = _softplus(h + b_ref[0:1, :hp])
    h = jnp.dot(h, w1_ref[...], preferred_element_type=jnp.float32)
    h = _softplus(h + b_ref[1:2, :hp])
    out = jnp.dot(h, w2_ref[...], preferred_element_type=jnp.float32)
    return out + b_ref[2:3, :nop]


def _node_mlp_kernel(x_ref, w0_ref, w1_ref, w2_ref, b_ref, o_ref):
    # Shapes (all padded, lane-dense):
    #   x_ref : (tile_s, n_in_p)     w0_ref: (n_in_p, h_p)
    #   w1_ref: (h_p, h_p)           w2_ref: (h_p, n_out_p)
    #   b_ref : (3, max(h_p, n_out_p))   rows = (b0, b1, b2)
    #   o_ref : (tile_s, n_out_p)
    hp = w0_ref.shape[1]
    nop = o_ref.shape[1]
    o_ref[...] = _mlp3(x_ref[...], w0_ref, w1_ref, w2_ref, b_ref, hp, nop)


def _make_euler_kernel(n_steps, dt):
    """Kernel running n_steps of explicit Euler entirely in VMEM."""
    def kernel(x_ref, w0_ref, w1_ref, w2_ref, b_ref, o_ref):
        hp = w0_ref.shape[1]
        nop = o_ref.shape[1]

        def body(_, z):
            return z + dt * _mlp3(z, w0_ref, w1_ref, w2_ref, b_ref, hp, nop)

        o_ref[...] = lax.fori_loop(0, n_steps, body, x_ref[...],
                                   unroll=(n_steps <= 16))
    return kernel


# ---------------------------------------------------------------------------
# Parameter / state packing (done ONCE, outside the solver loop)
# ---------------------------------------------------------------------------

def prepack_params(params):
    """Zero-pad params to lane-dense (multiple-of-128) shapes, pack biases.

    Zero padding is exact: padded hidden columns see softplus(0)=log 2 but
    multiply zero-padded weight rows, so they contribute nothing.
    """
    w0, b0, w1, b1, w2, b2 = params
    n_in, hidden = w0.shape
    n_out = w2.shape[1]

    n_in_p = _round_up(n_in, 128)
    h_p = _round_up(hidden, 128)
    n_out_p = _round_up(n_out, 128)
    b_w = max(h_p, n_out_p)

    w0p = jnp.zeros((n_in_p, h_p), jnp.float32).at[:n_in, :hidden].set(w0)
    w1p = jnp.zeros((h_p, h_p), jnp.float32).at[:hidden, :hidden].set(w1)
    w2p = jnp.zeros((h_p, n_out_p), jnp.float32).at[:hidden, :n_out].set(w2)

    bias_pack = jnp.zeros((3, b_w), jnp.float32)
    bias_pack = bias_pack.at[0, :hidden].set(b0.reshape(-1))
    bias_pack = bias_pack.at[1, :hidden].set(b1.reshape(-1))
    bias_pack = bias_pack.at[2, :n_out].set(b2.reshape(-1))

    dims = dict(n_in=n_in, hidden=hidden, n_out=n_out,
                n_in_p=n_in_p, h_p=h_p, n_out_p=n_out_p)
    return (w0p, w1p, w2p, bias_pack), dims


def pad_states(x_flat, dims, *, tile_cap=_TILE_S_CAP):
    """Zero-pad (S, n_in) -> (S_pad, n_in_p).  Call once, outside the solver loop."""
    s_cnt, n_in = x_flat.shape
    if n_in != dims["n_in"]:
        raise ValueError(f"x has {n_in} features, params expect {dims['n_in']}")
    s_pad = _round_up(max(s_cnt, 8), 8)
    if s_pad > tile_cap:
        s_pad = _round_up(s_pad, tile_cap)
    x_p = jnp.zeros((s_pad, dims["n_in_p"]), jnp.float32)
    return x_p.at[:s_cnt, :n_in].set(x_flat.astype(jnp.float32))


def unpad_states(out_p, s_cnt, dims):
    """Slice (S_pad, n_out_p) back to (S, n_out).  Call once, after the solve."""
    return out_p[:s_cnt, :dims["n_out"]]


def _resident_spec(shape):
    """BlockSpec for a weight that stays VMEM-resident across the grid.

    Constant index_map + single buffering: the block never changes, so the
    default double buffer only wasted VMEM and DMA bookkeeping.
    """
    return pl.BlockSpec(shape, lambda s: (0, 0), pipeline_mode=pl.Buffered(1))


# ---------------------------------------------------------------------------
# Pallas drivers
# ---------------------------------------------------------------------------

def node_rhs_padded(x_p, packed, dims, *, tile_s=None):
    """One vector-field evaluation on states in the padded (S_pad, n_in_p) layout.

    Returns the padded (S_pad, n_out_p) output.  No pad/slice on this path:
    solvers should keep their state in this layout for the whole integration.
    For S_pad <= 2048 the whole call runs as a single block (grid=(1,)).
    """
    w0p, w1p, w2p, bias_pack = packed
    s_pad, n_in_p = x_p.shape
    if n_in_p != dims["n_in_p"]:
        raise ValueError(f"padded state width {n_in_p} != expected {dims['n_in_p']}")
    if s_pad % 8 != 0:
        raise ValueError("s_pad must be a multiple of 8; use pad_states()")
    h_p, n_out_p = dims["h_p"], dims["n_out_p"]

    if tile_s is None:
        tile_s = min(s_pad, _TILE_S_CAP)   # one block for any reasonable S
    tile_s = _round_up(tile_s, 8)
    if s_pad % tile_s != 0:
        raise ValueError("s_pad must be a multiple of tile_s; use pad_states()")

    grid = (s_pad // tile_s,)
    return pl.pallas_call(
        _node_mlp_kernel,
        out_shape=jax.ShapeDtypeStruct((s_pad, n_out_p), jnp.float32),
        grid=grid,
        in_specs=[
            pl.BlockSpec((tile_s, n_in_p), lambda s: (s, 0)),   # x: tiled over S
            _resident_spec((n_in_p, h_p)),                      # w0
            _resident_spec((h_p, h_p)),                         # w1
            _resident_spec((h_p, n_out_p)),                     # w2
            _resident_spec(bias_pack.shape),                    # packed biases
        ],
        out_specs=pl.BlockSpec((tile_s, n_out_p), lambda s: (s, 0)),
        compiler_params=pltpu.CompilerParams(
            dimension_semantics=("parallel",)),
    )(x_p, w0p, w1p, w2p, bias_pack)


def node_forward(t, z, packed, dims, batch_size, dim):
    """Pallas implementation of NODE.forward(t, z) — single state.

    z: (batch_size, 1, dim, dim) float32 -> (batch_size, 1, dim, dim) float32.
    """
    del t  # unused by the PyTorch module's forward
    n_flat = batch_size * dim * dim
    if dims["n_in"] != n_flat or dims["n_out"] != n_flat:
        raise ValueError(
            f"params expect in={dims['n_in']}, out={dims['n_out']}; "
            f"data_in/data_out require batch*dim^2 = {n_flat}")
    x_p = pad_states(z.reshape(1, n_flat), dims)      # (8, n_in_p)
    out_p = node_rhs_padded(x_p, packed, dims)        # grid=(1,), one block
    return unpad_states(out_p, 1, dims).reshape(batch_size, 1, dim, dim)


def node_forward_many(t, zs, packed, dims, batch_size, dim, tile_s=None):
    """Vector field for S stacked states.  Convenience wrapper that pads/slices;
    performance-critical solvers should call node_rhs_padded() on a padded state
    they keep for the whole integration."""
    del t
    s_cnt = zs.shape[0]
    n_flat = batch_size * dim * dim
    if dims["n_in"] != n_flat or dims["n_out"] != n_flat:
        raise ValueError("param sizes inconsistent with batch*dim^2")
    x_p = pad_states(zs.reshape(s_cnt, n_flat), dims)
    out_p = node_rhs_padded(x_p, packed, dims, tile_s=tile_s)
    return unpad_states(out_p, s_cnt, dims).reshape(s_cnt, batch_size, 1, dim, dim)


def node_integrate_euler(z0, dt, n_steps, packed, dims, batch_size, dim):
    """Fused explicit-Euler integration: n_steps RHS evaluations in ONE pallas_call.

    Weights are DMA'd once; the state is carried through an in-kernel
    lax.fori_loop and never round-trips to HBM between steps.
    """
    n_flat = batch_size * dim * dim
    if dims["n_in"] != n_flat or dims["n_out"] != n_flat:
        raise ValueError("param sizes inconsistent with batch*dim^2")
    if dims["n_in_p"] != dims["n_out_p"]:
        raise ValueError("Euler integration requires n_in_p == n_out_p")

    w0p, w1p, w2p, bias_pack = packed
    x_p = pad_states(z0.reshape(1, n_flat), dims)     # pad once for the whole solve
    tile_s, n_in_p = x_p.shape
    h_p, n_out_p = dims["h_p"], dims["n_out_p"]

    kernel = _make_euler_kernel(int(n_steps), float(dt))
    out_p = pl.pallas_call(
        kernel,
        out_shape=jax.ShapeDtypeStruct((tile_s, n_out_p), jnp.float32),
        grid=(1,),
        in_specs=[
            pl.BlockSpec((tile_s, n_in_p), lambda s: (0, 0)),
            _resident_spec((n_in_p, h_p)),
            _resident_spec((h_p, h_p)),
            _resident_spec((h_p, n_out_p)),
            _resident_spec(bias_pack.shape),
        ],
        out_specs=pl.BlockSpec((tile_s, n_out_p), lambda s: (0, 0)),
        compiler_params=pltpu.CompilerParams(
            dimension_semantics=("arbitrary",)),
    )(x_p, w0p, w1p, w2p, bias_pack)
    return unpad_states(out_p, 1, dims).reshape(batch_size, 1, dim, dim)


# ---------------------------------------------------------------------------
# Init + pure-JAX reference
# ---------------------------------------------------------------------------

def init_params(key, input_size, hidden_size, output_size, n_layers=3):
    """Deterministic parameter init mirroring nn.Linear shapes.

    nn.Linear(i, o) stores weight (o, i); we store the transpose (i, o) so the
    kernel computes x @ W + b.  Biases kept 2D (1, o).
    """
    params = []
    for i in range(n_layers):
        in_dim = input_size if i == 0 else hidden_size
        out_dim = output_size if i == n_layers - 1 else hidden_size
        key, kw, kb = jax.random.split(key, 3)
        bound = 1.0 / jnp.sqrt(in_dim)
        w = jax.random.uniform(kw, (in_dim, out_dim), jnp.float32, -bound, bound)
        b = jax.random.uniform(kb, (1, out_dim), jnp.float32, -bound, bound)
        params += [w, b]
    return tuple(params)


def node_forward_ref(t, z, params, batch_size, dim):
    """Pure-JAX reference (unpadded params) for correctness checking."""
    del t
    w0, b0, w1, b1, w2, b2 = params
    x = z.reshape(1, batch_size * dim * dim).astype(jnp.float32)
    h = _softplus(x @ w0 + b0)
    h = _softplus(h @ w1 + b1)
    out = h @ w2 + b2
    return out.reshape(batch_size, 1, dim, dim)


if __name__ == "__main__":
    # Channels must be 1 and input_size == output_size == batch*dim^2 for the
    # module's data_in/data_out reshapes to hold.
    batch_size = 2
    dim = 10
    hidden_size = 32
    input_size = batch_size * dim * dim   # 200
    output_size = batch_size * dim * dim  # 200

    key = jax.random.PRNGKey(0)
    k_z, k_zs, k_p = jax.random.split(key, 3)
    params = init_params(k_p, input_size, hidden_size, output_size, n_layers=3)
    packed, dims = prepack_params(params)
    t = jnp.float32(0.0)

    # --- Single-state forward: exact NODE.forward semantics (grid=(1,)) ---
    z = jax.random.normal(k_z, (batch_size, 1, dim, dim), jnp.float32)
    out = jax.block_until_ready(node_forward(t, z, packed, dims, batch_size, dim))
    ref = node_forward_ref(t, z, params, batch_size, dim)
    assert out.shape == (batch_size, 1, dim, dim)
    assert jnp.allclose(out, ref, atol=1e-4, rtol=1e-4)

    # --- M-batched RHS in the padded layout: pad once, single block, slice once ---
    S = 32
    zs = jax.random.normal(k_zs, (S, batch_size, 1, dim, dim), jnp.float32)
    x_p = pad_states(zs.reshape(S, -1), dims)                  # outside the solver loop
    out_p = jax.block_until_ready(node_rhs_padded(x_p, packed, dims))
    outs = unpad_states(out_p, S, dims).reshape(S, batch_size, 1, dim, dim)
    refs = jax.vmap(lambda zz: node_forward_ref(t, zz, params, batch_size, dim))(zs)
    assert outs.shape == (S, batch_size, 1, dim, dim)
    assert jnp.allclose(outs, refs, atol=1e-4, rtol=1e-4)

    # --- Fused integration: 8 RHS evals in one pallas_call, weights DMA'd once ---
    n_steps, dt = 8, 0.05
    zT = jax.block_until_ready(
        node_integrate_euler(z, dt, n_steps, packed, dims, batch_size, dim))
    z_ref = z
    for _ in range(n_steps):
        z_ref = z_ref + dt * node_forward_ref(t, z_ref, params, batch_size, dim)
    assert zT.shape == (batch_size, 1, dim, dim)
    assert jnp.allclose(zT, z_ref, atol=2e-3, rtol=2e-3)

    print("KERNEL_OK")
</pallas_src>

<mosaic_0001>
module attributes {stable_mosaic.version = 11 : i64} {
  func.func @_node_mlp_kernel(%arg0: i32, %arg1: memref<8x256xf32, #tpu.memory_space<vmem>>, %arg2: memref<256x128xf32, #tpu.memory_space<vmem>>, %arg3: memref<128x128xf32, #tpu.memory_space<vmem>>, %arg4: memref<128x256xf32, #tpu.memory_space<vmem>>, %arg5: memref<3x256xf32, #tpu.memory_space<vmem>>, %arg6: memref<8x256xf32, #tpu.memory_space<vmem>>) attributes {dimension_semantics = [#tpu.dimension_semantics<parallel>], iteration_bounds = array<i64: 1>, scalar_prefetch = 0 : i64, scratch_operands = 0 : i64, tpu.core_type = #tpu.core_type<tc>, window_params = [{transform_indices = @transform_0, window_bounds = array<i64: 8, 256>}, {pipeline_mode = #tpu.pipeline_mode<synchronous>, transform_indices = @transform_1, window_bounds = array<i64: 256, 128>}, {pipeline_mode = #tpu.pipeline_mode<synchronous>, transform_indices = @transform_2, window_bounds = array<i64: 128, 128>}, {pipeline_mode = #tpu.pipeline_mode<synchronous>, transform_indices = @transform_3, window_bounds = array<i64: 128, 256>}, {pipeline_mode = #tpu.pipeline_mode<synchronous>, transform_indices = @transform_4, window_bounds = array<i64: 3, 256>}, {transform_indices = @transform_5, window_bounds = array<i64: 8, 256>}]} {
    %c0 = arith.constant 0 : index
    %c0_0 = arith.constant 0 : index
    %0 = vector.load %arg1[%c0, %c0_0] : memref<8x256xf32, #tpu.memory_space<vmem>>, vector<8x256xf32>
    %c0_1 = arith.constant 0 : index
    %c0_2 = arith.constant 0 : index
    %1 = vector.load %arg2[%c0_1, %c0_2] : memref<256x128xf32, #tpu.memory_space<vmem>>, vector<256x128xf32>
    %cst = arith.constant dense<0.000000e+00> : vector<8x128xf32>
    %2 = tpu.matmul %0, %1, %cst {dimension_numbers = #tpu.dot_dimension_numbers<[1], [0], [0], [1], [0, 0, 1, 1], [], []>} : vector<8x256xf32>, vector<256x128xf32>, vector<8x128xf32> -> vector<8x128xf32>
    %c0_3 = arith.constant 0 : index
    %c0_4 = arith.constant 0 : index
    %3 = vector.load %arg5[%c0_3, %c0_4] : memref<3x256xf32, #tpu.memory_space<vmem>>, vector<1x128xf32>
    %4 = vector.broadcast %3 : vector<1x128xf32> to vector<8x128xf32>
    %5 = arith.addf %2, %4 : vector<8x128xf32>
    %cst_5 = arith.constant 2.000000e+01 : f32
    %6 = vector.broadcast %cst_5 : f32 to vector<8x128xf32>
    %7 = arith.cmpf ogt, %5, %6 : vector<8x128xf32>
    %cst_6 = arith.constant 2.000000e+01 : f32
    %8 = vector.broadcast %cst_6 : f32 to vector<8x128xf32>
    %9 = arith.minimumf %5, %8 : vector<8x128xf32>
    %10 = math.exp %9 : vector<8x128xf32>
    %11 = math.log1p %10 : vector<8x128xf32>
    %12 = arith.select %7, %5, %11 : vector<8x128xi1>, vector<8x128xf32>
    %c0_7 = arith.constant 0 : index
    %c0_8 = arith.constant 0 : index
    %13 = vector.load %arg3[%c0_7, %c0_8] : memref<128x128xf32, #tpu.memory_space<vmem>>, vector<128x128xf32>
    %cst_9 = arith.constant dense<0.000000e+00> : vector<8x128xf32>
    %14 = tpu.matmul %12, %13, %cst_9 {dimension_numbers = #tpu.dot_dimension_numbers<[1], [0], [0], [1], [0, 0, 1, 1], [], []>} : vector<8x128xf32>, vector<128x128xf32>, vector<8x128xf32> -> vector<8x128xf32>
    %c1 = arith.constant 1 : index
    %c0_10 = arith.constant 0 : index
    %15 = vector.load %arg5[%c1, %c0_10] : memref<3x256xf32, #tpu.memory_space<vmem>>, vector<1x128xf32>
    %16 = vector.broadcast %15 : vector<1x128xf32> to vector<8x128xf32>
    %17 = arith.addf %14, %16 : vector<8x128xf32>
    %cst_11 = arith.constant 2.000000e+01 : f32
    %18 = vector.broadcast %cst_11 : f32 to vector<8x128xf32>
    %19 = arith.cmpf ogt, %17, %18 : vector<8x128xf32>
    %cst_12 = arith.constant 2.000000e+01 : f32
    %20 = vector.broadcast %cst_12 : f32 to vector<8x128xf32>
    %21 = arith.minimumf %17, %20 : vector<8x128xf32>
    %22 = math.exp %21 : vector<8x128xf32>
    %23 = math.log1p %22 : vector<8x128xf32>
    %24 = arith.select %19, %17, %23 : vector<8x128xi1>, vector<8x128xf32>
    %c0_13 = arith.constant 0 : index
    %c0_14 = arith.constant 0 : index
    %25 = vector.load %arg4[%c0_13, %c0_14] : memref<128x256xf32, #tpu.memory_space<vmem>>, vector<128x256xf32>
    %cst_15 = arith.constant dense<0.000000e+00> : vector<8x256xf32>
    %26 = tpu.matmul %24, %25, %cst_15 {dimension_numbers = #tpu.dot_dimension_numbers<[1], [0], [0], [1], [0, 0, 1, 1], [], []>} : vector<8x128xf32>, vector<128x256xf32>, vector<8x256xf32> -> vector<8x256xf32>
    %c2 = arith.constant 2 : index
    %c0_16 = arith.constant 0 : index
    %27 = vector.load %arg5[%c2, %c0_16] : memref<3x256xf32, #tpu.memory_space<vmem>>, vector<1x256xf32>
    %28 = vector.broadcast %27 : vector<1x256xf32> to vector<8x256xf32>
    %29 = arith.addf %26, %28 : vector<8x256xf32>
    %c0_17 = arith.constant 0 : index
    %c0_18 = arith.constant 0 : index
    %30 = vector.load %arg6[%c0_17, %c0_18] : memref<8x256xf32, #tpu.memory_space<vmem>>, vector<8x256xf32>
    tpu.vector_store %arg6[%c0_17, %c0_18], %29 {strides = array<i32>} : memref<8x256xf32, #tpu.memory_space<vmem>>, vector<8x256xf32>,
    return
  }
  func.func @transform_0(%arg0: i32) -> (i32, i32) {
    %c0_i32 = arith.constant 0 : i32
    %c0_i32_0 = arith.constant 0 : i32
    return %arg0, %c0_i32 : i32, i32
  }
  func.func @transform_1(%arg0: i32) -> (i32, i32) {
    %c0_i32 = arith.constant 0 : i32
    %c0_i32_0 = arith.constant 0 : i32
    %c0_i32_1 = arith.constant 0 : i32
    return %c0_i32, %c0_i32_0 : i32, i32
  }
  func.func @transform_2(%arg0: i32) -> (i32, i32) {
    %c0_i32 = arith.constant 0 : i32
    %c0_i32_0 = arith.constant 0 : i32
    %c0_i32_1 = arith.constant 0 : i32
    return %c0_i32, %c0_i32_0 : i32, i32
  }
  func.func @transform_3(%arg0: i32) -> (i32, i32) {
    %c0_i32 = arith.constant 0 : i32
    %c0_i32_0 = arith.constant 0 : i32
    %c0_i32_1 = arith.constant 0 : i32
    return %c0_i32, %c0_i32_0 : i32, i32
  }
  func.func @transform_4(%arg0: i32) -> (i32, i32) {
    %c0_i32 = arith.constant 0 : i32
    %c0_i32_0 = arith.constant 0 : i32
    %c0_i32_1 = arith.constant 0 : i32
    return %c0_i32, %c0_i32_0 : i32, i32
  }
  func.func @transform_5(%arg0: i32) -> (i32, i32) {
    %c0_i32 = arith.constant 0 : i32
    %c0_i32_0 = arith.constant 0 : i32
    return %arg0, %c0_i32 : i32, i32
  }
}

</mosaic_0001>

<llo_original>
// kernel: tpu_custom_call.1
$region0: #{tpu_custom_call.1}
  #allocation0 [shape = 'u32[]', space=smem, size = 0x4, offset = 0x4, fixed_abs, tag = 'smem constant byte address 0x4 - core index']
  #allocation1 [shape = 'u32[144,128]{1,0:T(1,128)}', space=vmem, size = 0x12000, scoped, tag = 'internal scratch']
  %s0 = inlined_call_operand.hbm [shape: f32[8,256], index: 0, kind: input, shape index: {}]
  %s1 = inlined_call_operand.hbm [shape: f32[256,128], index: 1, kind: input, shape index: {}]
  %s2 = inlined_call_operand.hbm [shape: f32[128,128], index: 2, kind: input, shape index: {}]
  %s3 = inlined_call_operand.hbm [shape: f32[128,256], index: 3, kind: input, shape index: {}]
  %s4 = inlined_call_operand.vmem [shape: f32[3,256], index: 4, kind: input, shape index: {}]
  %s5 = inlined_call_operand.hbm [shape: f32[8,256], index: 5, kind: output, shape index: {}]
  %s6 = sld [smem:[#allocation0]]
  $region46: #{tpu_custom_call.1} parent=0
    _
  %s8 = ssub.s32 1, %s6
  %s9 = scalar_select 0, %s8, %s6
  $region1: #{tpu_custom_call.1} parent=0
    #allocation2 [shape = 'u8[8192]{0}', space=vmem, size = 0x2000, scoped, tag = 'input window, operand 0, single buffered']
    #allocation3 [shape = 's32[1]{0}', space=sflag, size = 0x4, scoped, tag = 'scoped memory for tpu_custom_call.1']
    #allocation4 [shape = 's32[1]{0}', space=sflag, size = 0x4, scoped, tag = 'scoped memory for tpu_custom_call.1']
    #allocation5 [shape = 'u8[131072]{0}', space=vmem, size = 0x20000, scoped, tag = 'input window, operand 1, single buffered']
    #allocation6 [shape = 's32[1]{0}', space=sflag, size = 0x4, scoped, tag = 'scoped memory for tpu_custom_call.1']
    #allocation7 [shape = 'u8[65536]{0}', space=vmem, size = 0x10000, scoped, tag = 'input window, operand 2, single buffered']
    #allocation8 [shape = 'u8[131072]{0}', space=vmem, size = 0x20000, scoped, tag = 'input window, operand 3, single buffered']
    #allocation9 [shape = 's32[1]{0}', space=sflag, size = 0x4, scoped, tag = 'scoped memory for tpu_custom_call.1']
    #allocation10 [shape = 'u8[8192]{0}', space=vmem, size = 0x2000, scoped, tag = 'output window, operand 0, single buffered']
    %10 = vsyncpa [#allocation3], 0
    %11 = vsyncpa [#allocation6], 0
    %12 = vsyncpa [#allocation9], 0
    %13 = vsyncpa [#allocation4], 0
    // Predicated region
    $region2: #{tpu_custom_call.1} parent=1 // pred_check
      _
    $region3: #{tpu_custom_call.1} parent=1 // pred_check_branch
      %15 = sbr.rel (0) target = $region5
    $region4: #{tpu_custom_call.1} parent=1 // pred_region
      %s17 = ssub.s32 256, 256
      %18 = vsyncadd [#allocation3], %s17
      %s20 = sshll.u32 [#allocation2], 4
      %s21 = int_to_ptr.vmem [resolvable:$true] %s20
      %23 = dma.hbm_to_vmem [thread:$0]  %s0, 256, %s21, [#allocation3]
    $region5: #{tpu_custom_call.1} parent=1 // pred_fallthru
      _
    // Predicated region
    $region6: #{tpu_custom_call.1} parent=1 // pred_check
      _
    $region7: #{tpu_custom_call.1} parent=1 // pred_check_branch
      %25 = sbr.rel (0) target = $region9
    $region8: #{tpu_custom_call.1} parent=1 // pred_region
      %s27 = ssub.s32 4096, 4096
      %28 = vsyncadd [#allocation6], %s27
      %s29 = sshll.u32 [#allocation5], 4
      %s30 = int_to_ptr.vmem [resolvable:$true] %s29
      %35 = dma.hbm_to_vmem [thread:$0]  %s1, 4096, %s30, [#allocation6], 128, 128, 8
    $region9: #{tpu_custom_call.1} parent=1 // pred_fallthru
      _
    // Predicated region
    $region10: #{tpu_custom_call.1} parent=1 // pred_check
      _
    $region11: #{tpu_custom_call.1} parent=1 // pred_check_branch
      %37 = sbr.rel (0) target = $region13
    $region12: #{tpu_custom_call.1} parent=1 // pred_region
      %s39 = ssub.s32 2048, 2048
      %40 = vsyncadd [#allocation6], %s39
      %s41 = sshll.u32 [#allocation7], 4
      %s42 = int_to_ptr.vmem [resolvable:$true] %s41
      %47 = dma.hbm_to_vmem [thread:$0]  %s2, 2048, %s42, [#allocation6], 128, 128, 8
    $region13: #{tpu_custom_call.1} parent=1 // pred_fallthru
      _
    // Predicated region
    $region14: #{tpu_custom_call.1} parent=1 // pred_check
      _
    $region15: #{tpu_custom_call.1} parent=1 // pred_check_branch
      %49 = sbr.rel (0) target = $region17
    $region16: #{tpu_custom_call.1} parent=1 // pred_region
      %s51 = ssub.s32 4096, 4096
      %52 = vsyncadd [#allocation9], %s51
      %s53 = sshll.u32 [#allocation8], 4
      %s54 = int_to_ptr.vmem [resolvable:$true] %s53
      %59 = dma.hbm_to_vmem [thread:$0]  %s3, 4096, %s54, [#allocation9], 256, 256, 16
    $region17: #{tpu_custom_call.1} parent=1 // pred_fallthru
      _
    // Predicated region
    $region18: #{tpu_custom_call.1} parent=1 // pred_check
      _
    $region19: #{tpu_custom_call.1} parent=1 // pred_check_branch
      %61 = sbr.rel (0) target = $region21
    $region20: #{tpu_custom_call.1} parent=1 // pred_region
      _
    $region21: #{tpu_custom_call.1} parent=1 // pred_fallthru
      _
    // Predicated region
    $region22: #{tpu_custom_call.1} parent=1 // pred_check
      _
    $region23: #{tpu_custom_call.1} parent=1 // pred_check_branch
      %63 = sbr.rel (0) target = $region25
    $region24: #{tpu_custom_call.1} parent=1 // pred_region
      %64 = dma.done [#allocation3], 256
    $region25: #{tpu_custom_call.1} parent=1 // pred_fallthru
      _
    // Predicated region
    $region26: #{tpu_custom_call.1} parent=1 // pred_check
      _
    $region27: #{tpu_custom_call.1} parent=1 // pred_check_branch
      %66 = sbr.rel (0) target = $region29
    $region28: #{tpu_custom_call.1} parent=1 // pred_region
      %67 = dma.done [#allocation6], 4096
    $region29: #{tpu_custom_call.1} parent=1 // pred_fallthru
      _
    // Predicated region
    $region30: #{tpu_custom_call.1} parent=1 // pred_check
      _
    $region31: #{tpu_custom_call.1} parent=1 // pred_check_branch
      %69 = sbr.rel (0) target = $region33
    $region32: #{tpu_custom_call.1} parent=1 // pred_region
      %70 = dma.done [#allocation6], 2048
    $region33: #{tpu_custom_call.1} parent=1 // pred_fallthru
      _
    // Predicated region
    $region34: #{tpu_custom_call.1} parent=1 // pred_check
      _
    $region35: #{tpu_custom_call.1} parent=1 // pred_check_branch
      %72 = sbr.rel (0) target = $region37
    $region36: #{tpu_custom_call.1} parent=1 // pred_region
      %73 = dma.done [#allocation9], 4096
    $region37: #{tpu_custom_call.1} parent=1 // pred_fallthru
      _
    %v74 = vld [vmem:[#allocation2] sm:$0xff]
    %v75 = vld [vmem:[#allocation2 + $0x8] sm:$0xff]
    %v76 = vld [vmem:[#allocation5] sm:$0xff]
    %v77 = vld [vmem:[#allocation5 + $0x8] sm:$0xff]
    %v78 = vld [vmem:[#allocation5 + $0x10] sm:$0xff]
    %v79 = vld [vmem:[#allocation5 + $0x18] sm:$0xff]
    %v80 = vld [vmem:[#allocation5 + $0x20] sm:$0xff]
    %v81 = vld [vmem:[#allocation5 + $0x28] sm:$0xff]
    %v82 = vld [vmem:[#allocation5 + $0x30] sm:$0xff]
    %v83 = vld [vmem:[#allocation5 + $0x38] sm:$0xff]
    %v84 = vld [vmem:[#allocation5 + $0x40] sm:$0xff]
    %v85 = vld [vmem:[#allocation5 + $0x48] sm:$0xff]
    %v86 = vld [vmem:[#allocation5 + $0x50] sm:$0xff]
    %v87 = vld [vmem:[#allocation5 + $0x58] sm:$0xff]
    %v88 = vld [vmem:[#allocation5 + $0x60] sm:$0xff]
    %v89 = vld [vmem:[#allocation5 + $0x68] sm:$0xff]
    %v90 = vld [vmem:[#allocation5 + $0x70] sm:$0xff]
    %v91 = vld [vmem:[#allocation5 + $0x78] sm:$0xff]
    %v92 = vld [vmem:[#allocation5 + $0x80] sm:$0xff]
    %v93 = vld [vmem:[#allocation5 + $0x88] sm:$0xff]
    %v94 = vld [vmem:[#allocation5 + $0x90] sm:$0xff]
    %v95 = vld [vmem:[#allocation5 + $0x98] sm:$0xff]
    %v96 = vld [vmem:[#allocation5 + $0xa0] sm:$0xff]
    %v97 = vld [vmem:[#allocation5 + $0xa8] sm:$0xff]
    %v98 = vld [vmem:[#allocation5 + $0xb0] sm:$0xff]
    %v99 = vld [vmem:[#allocation5 + $0xb8] sm:$0xff]
    %v100 = vld [vmem:[#allocation5 + $0xc0] sm:$0xff]
    %v101 = vld [vmem:[#allocation5 + $0xc8] sm:$0xff]
    %v102 = vld [vmem:[#allocation5 + $0xd0] sm:$0xff]
    %v103 = vld [vmem:[#allocation5 + $0xd8] sm:$0xff]
    %v104 = vld [vmem:[#allocation5 + $0xe0] sm:$0xff]
    %v105 = vld [vmem:[#allocation5 + $0xe8] sm:$0xff]
    %v106 = vld [vmem:[#allocation5 + $0xf0] sm:$0xff]
    %v107 = vld [vmem:[#allocation5 + $0xf8] sm:$0xff]
    %v108 = vld [vmem:[%s4] sm:$0x1]
    %v109 = vlaneseq
    %v110 = vshrl.u32 %v109, 7
    %v111 = vsub.s32 0, %v110
    %v112 = vrot.slane %v108, %v111
    %113 = vmatprep.subr.mxu0 0.0
    %114 = vmatpush1.msra.mxu0 %v76
    %115 = vmatprep.subr.mxu0 0.0
    %116 = vmatpush1.msra.mxu0 %v77
    %117 = vmatprep.subr.mxu0 0.0
    %118 = vmatpush1.msra.mxu0 %v78
    %119 = vmatprep.subr.mxu0 0.0
    %120 = vmatpush1.msra.mxu0 %v79
    %121 = vmatprep.subr.mxu0 0.0
    %122 = vmatpush1.msra.mxu0 %v80
    %123 = vmatprep.subr.mxu0 0.0
    %124 = vmatpush1.msra.mxu0 %v81
    %125 = vmatprep.subr.mxu0 0.0
    %126 = vmatpush1.msra.mxu0 %v82
    %127 = vmatprep.subr.mxu0 0.0
    %128 = vmatpush1.msra.mxu0 %v83
    %129 = vmatprep.subr.mxu0 0.0
    %130 = vmatpush1.msra.mxu0 %v84
    %131 = vmatprep.subr.mxu0 0.0
    %132 = vmatpush1.msra.mxu0 %v85
    %133 = vmatprep.subr.mxu0 0.0
    %134 = vmatpush1.msra.mxu0 %v86
    %135 = vmatprep.subr.mxu0 0.0
    %136 = vmatpush1.msra.mxu0 %v87
    %137 = vmatprep.subr.mxu0 0.0
    %138 = vmatpush1.msra.mxu0 %v88
    %139 = vmatprep.subr.mxu0 0.0
    %140 = vmatpush1.msra.mxu0 %v89
    %141 = vmatprep.subr.mxu0 0.0
    %142 = vmatpush1.msra.mxu0 %v90
    %143 = vmatprep.subr.mxu0 0.0
    %144 = vmatpush1.msra.mxu0 %v91
    %145 = vmatprep.subr.mxu0 0.0
    %146 = vmatpush1.msra.mxu0 %v92
    %147 = vmatprep.subr.mxu0 0.0
    %148 = vmatpush1.msra.mxu0 %v93
    %149 = vmatprep.subr.mxu0 0.0
    %150 = vmatpush1.msra.mxu0 %v94
    %151 = vmatprep.subr.mxu0 0.0
    %152 = vmatpush1.msra.mxu0 %v95
    %153 = vmatprep.subr.mxu0 0.0
    %154 = vmatpush1.msra.mxu0 %v96
    %155 = vmatprep.subr.mxu0 0.0
    %156 = vmatpush1.msra.mxu0 %v97
    %157 = vmatprep.subr.mxu0 0.0
    %158 = vmatpush1.msra.mxu0 %v98
    %159 = vmatprep.subr.mxu0 0.0
    %160 = vmatpush1.msra.mxu0 %v99
    %161 = vmatprep.subr.mxu0 0.0
    %162 = vmatpush1.msra.mxu0 %v100
    %163 = vmatprep.subr.mxu0 0.0
    %164 = vmatpush1.msra.mxu0 %v101
    %165 = vmatprep.subr.mxu0 0.0
    %166 = vmatpush1.msra.mxu0 %v102
    %167 = vmatprep.subr.mxu0 0.0
    %168 = vmatpush1.msra.mxu0 %v103
    %169 = vmatprep.subr.mxu0 0.0
    %170 = vmatpush1.msra.mxu0 %v104
    %171 = vmatprep.subr.mxu0 0.0
    %172 = vmatpush1.msra.mxu0 %v105
    %173 = vmatprep.subr.mxu0 0.0
    %174 = vmatpush1.msra.mxu0 %v106
    %175 = vmatprep.subr.mxu0 0.0
    %176 = vmatpush1.msra.mxu0 %v107
    %177 = vmatprep.mubr.f32.mxu0 %v75
    %178 = vmatmul.mubr.f32.gmra.mrb[0].mxu0 %v74
    %v179 = vpop.f32.mrb[0].mxu0
    %v180 = vadd.f32 %v112, %v179
    %v181 = vpop.f32.mrb[0].mxu0
    %182 = vdwg.mxu0
    %vm183 = vcmp.gt.f32.partialorder %v180, 20.0
    %v184 = vmin.f32 %v180, 20.0
    %v185 = vmul.f32 %v184, 1.442695
    %v186 = vpow.pop %v185
    %v187 = vadd.f32 %v186, 1.0
    %v188 = vlog2.pop %v187
    %v189 = vmul.f32 %v188, 0.6931472
    %v190 = vmul.f32 -0.5, %v186
    %v191 = vadd.f32 %v190, 1.0
    %v192 = vmul.f32 %v191, %v186
    %v193 = vand.u32 2147483647, %v186
    %vm194 = vcmp.lt.f32.partialorder %v193, 0.0004427343
    %v195 = vsel %vm194, %v192, %v189
    %v196 = vsel %vm183, %v180, %v195
    %v197 = vld [vmem:[#allocation7] sm:$0xff]
    %v198 = vld [vmem:[#allocation7 + $0x8] sm:$0xff]
    %v199 = vld [vmem:[#allocation7 + $0x10] sm:$0xff]
    %v200 = vld [vmem:[#allocation7 + $0x18] sm:$0xff]
    %v201 = vld [vmem:[#allocation7 + $0x20] sm:$0xff]
    %v202 = vld [vmem:[#allocation7 + $0x28] sm:$0xff]
    %v203 = vld [vmem:[#allocation7 + $0x30] sm:$0xff]
    %v204 = vld [vmem:[#allocation7 + $0x38] sm:$0xff]
    %v205 = vld [vmem:[#allocation7 + $0x40] sm:$0xff]
    %v206 = vld [vmem:[#allocation7 + $0x48] sm:$0xff]
    %v207 = vld [vmem:[#allocation7 + $0x50] sm:$0xff]
    %v208 = vld [vmem:[#allocation7 + $0x58] sm:$0xff]
    %v209 = vld [vmem:[#allocation7 + $0x60] sm:$0xff]
    %v210 = vld [vmem:[#allocation7 + $0x68] sm:$0xff]
    %v211 = vld [vmem:[#allocation7 + $0x70] sm:$0xff]
    %v212 = vld [vmem:[#allocation7 + $0x78] sm:$0xff]
    %v213 = vld [vmem:[%s4 + $0x1] sm:$0x1]
    %v214 = vlaneseq
    %v215 = vshrl.u32 %v214, 7
    %v216 = vsub.s32 0, %v215
    %v217 = vrot.slane %v213, %v216
    %218 = vmatprep.subr.mxu0 0.0
    %219 = vmatpush1.msra.mxu0 %v197
    %220 = vmatprep.subr.mxu0 0.0
    %221 = vmatpush1.msra.mxu0 %v198
    %222 = vmatprep.subr.mxu0 0.0
    %223 = vmatpush1.msra.mxu0 %v199
    %224 = vmatprep.subr.mxu0 0.0
    %225 = vmatpush1.msra.mxu0 %v200
    %226 = vmatprep.subr.mxu0 0.0
    %227 = vmatpush1.msra.mxu0 %v201
    %228 = vmatprep.subr.mxu0 0.0
    %229 = vmatpush1.msra.mxu0 %v202
    %230 = vmatprep.subr.mxu0 0.0
    %231 = vmatpush1.msra.mxu0 %v203
    %232 = vmatprep.subr.mxu0 0.0
    %233 = vmatpush1.msra.mxu0 %v204
    %234 = vmatprep.subr.mxu0 0.0
    %235 = vmatpush1.msra.mxu0 %v205
    %236 = vmatprep.subr.mxu0 0.0
    %237 = vmatpush1.msra.mxu0 %v206
    %238 = vmatprep.subr.mxu0 0.0
    %239 = vmatpush1.msra.mxu0 %v207
    %240 = vmatprep.subr.mxu0 0.0
    %241 = vmatpush1.msra.mxu0 %v208
    %242 = vmatprep.subr.mxu0 0.0
    %243 = vmatpush1.msra.mxu0 %v209
    %244 = vmatprep.subr.mxu0 0.0
    %245 = vmatpush1.msra.mxu0 %v210
    %246 = vmatprep.subr.mxu0 0.0
    %247 = vmatpush1.msra.mxu0 %v211
    %248 = vmatprep.subr.mxu0 0.0
    %249 = vmatpush1.msra.mxu0 %v212
    %250 = vmatprep.subr.mxu0 0.0
    %251 = vmatpush1.msra.mxu0 0.0
    %252 = vmatprep.subr.mxu0 0.0
    %253 = vmatpush1.msra.mxu0 0.0
    %254 = vmatprep.subr.mxu0 0.0
    %255 = vmatpush1.msra.mxu0 0.0
    %256 = vmatprep.subr.mxu0 0.0
    %257 = vmatpush1.msra.mxu0 0.0
    %258 = vmatprep.subr.mxu0 0.0
    %259 = vmatpush1.msra.mxu0 0.0
    %260 = vmatprep.subr.mxu0 0.0
    %261 = vmatpush1.msra.mxu0 0.0
    %262 = vmatprep.subr.mxu0 0.0
    %263 = vmatpush1.msra.mxu0 0.0
    %264 = vmatprep.subr.mxu0 0.0
    %265 = vmatpush1.msra.mxu0 0.0
    %266 = vmatprep.subr.mxu0 0.0
    %267 = vmatpush1.msra.mxu0 0.0
    %268 = vmatprep.subr.mxu0 0.0
    %269 = vmatpush1.msra.mxu0 0.0
    %270 = vmatprep.subr.mxu0 0.0
    %271 = vmatpush1.msra.mxu0 0.0
    %272 = vmatprep.subr.mxu0 0.0
    %273 = vmatpush1.msra.mxu0 0.0
    %274 = vmatprep.subr.mxu0 0.0
    %275 = vmatpush1.msra.mxu0 0.0
    %276 = vmatprep.subr.mxu0 0.0
    %277 = vmatpush1.msra.mxu0 0.0
    %278 = vmatprep.subr.mxu0 0.0
    %279 = vmatpush1.msra.mxu0 0.0
    %280 = vmatprep.subr.mxu0 0.0
    %281 = vmatpush1.msra.mxu0 0.0
    %282 = vmatprep.mubr.f32.mxu0 0.0
    %283 = vmatmul.mubr.f32.gmra.mrb[0].mxu0 %v196
    %v284 = vpop.f32.mrb[0].mxu0
    %v285 = vadd.f32 %v217, %v284
    %v286 = vpop.f32.mrb[0].mxu0
    %287 = vdwg.mxu0
    %vm288 = vcmp.gt.f32.partialorder %v285, 20.0
    %v289 = vmin.f32 %v285, 20.0
    %v290 = vmul.f32 %v289, 1.442695
    %v291 = vpow.pop %v290
    %v292 = vadd.f32 %v291, 1.0
    %v293 = vlog2.pop %v292
    %v294 = vmul.f32 %v293, 0.6931472
    %v295 = vmul.f32 -0.5, %v291
    %v296 = vadd.f32 %v295, 1.0
    %v297 = vmul.f32 %v296, %v291
    %v298 = vand.u32 2147483647, %v291
    %vm299 = vcmp.lt.f32.partialorder %v298, 0.0004427343
    %v300 = vsel %vm299, %v297, %v294
    %v301 = vsel %vm288, %v285, %v300
    %v302 = vld [vmem:[#allocation8] sm:$0xff]
    %v303 = vld [vmem:[#allocation8 + $0x8] sm:$0xff]
    %v304 = vld [vmem:[#allocation8 + $0x10] sm:$0xff]
    %v305 = vld [vmem:[#allocation8 + $0x18] sm:$0xff]
    %v306 = vld [vmem:[#allocation8 + $0x20] sm:$0xff]
    %v307 = vld [vmem:[#allocation8 + $0x28] sm:$0xff]
    %v308 = vld [vmem:[#allocation8 + $0x30] sm:$0xff]
    %v309 = vld [vmem:[#allocation8 + $0x38] sm:$0xff]
    %v310 = vld [vmem:[#allocation8 + $0x40] sm:$0xff]
    %v311 = vld [vmem:[#allocation8 + $0x48] sm:$0xff]
    %v312 = vld [vmem:[#allocation8 + $0x50] sm:$0xff]
    %v313 = vld [vmem:[#allocation8 + $0x58] sm:$0xff]
    %v314 = vld [vmem:[#allocation8 + $0x60] sm:$0xff]
    %v315 = vld [vmem:[#allocation8 + $0x68] sm:$0xff]
    %v316 = vld [vmem:[#allocation8 + $0x70] sm:$0xff]
    %v317 = vld [vmem:[#allocation8 + $0x78] sm:$0xff]
    %v318 = vld [vmem:[#allocation8 + $0x80] sm:$0xff]
    %v319 = vld [vmem:[#allocation8 + $0x88] sm:$0xff]
    %v320 = vld [vmem:[#allocation8 + $0x90] sm:$0xff]
    %v321 = vld [vmem:[#allocation8 + $0x98] sm:$0xff]
    %v322 = vld [vmem:[#allocation8 + $0xa0] sm:$0xff]
    %v323 = vld [vmem:[#allocation8 + $0xa8] sm:$0xff]
    %v324 = vld [vmem:[#allocation8 + $0xb0] sm:$0xff]
    %v325 = vld [vmem:[#allocation8 + $0xb8] sm:$0xff]
    %v326 = vld [vmem:[#allocation8 + $0xc0] sm:$0xff]
    %v327 = vld [vmem:[#allocation8 + $0xc8] sm:$0xff]
    %v328 = vld [vmem:[#allocation8 + $0xd0] sm:$0xff]
    %v329 = vld [vmem:[#allocation8 + $0xd8] sm:$0xff]
    %v330 = vld [vmem:[#allocation8 + $0xe0] sm:$0xff]
    %v331 = vld [vmem:[#allocation8 + $0xe8] sm:$0xff]
    %v332 = vld [vmem:[#allocation8 + $0xf0] sm:$0xff]
    %v333 = vld [vmem:[#allocation8 + $0xf8] sm:$0xff]
    %s334 = scalar_lea.vmem %s4, 2
    %v335 = vld [vmem:[%s334] ss:$4 sm:$0x3]
    %v337 = vlaneseq
    %v338 = vshrl.u32 %v337, 7
    %v339 = vsub.s32 0, %v338
    %v340 = vrot.slane %v335, %v339
    %v341 = vlaneseq
    %v342 = vshrl.u32 %v341, 7
    %v343 = vsub.s32 1, %v342
    %v344 = vrot.slane %v335, %v343
    %347 = vmatprep.subr.mxu0 %v303
    %348 = vmatpush1.msra.mxu0 %v302
    %349 = vmatprep.subr.mxu0 %v305
    %350 = vmatpush1.msra.mxu0 %v304
    %351 = vmatprep.subr.mxu0 %v307
    %352 = vmatpush1.msra.mxu0 %v306
    %353 = vmatprep.subr.mxu0 %v309
    %354 = vmatpush1.msra.mxu0 %v308
    %355 = vmatprep.subr.mxu0 %v311
    %356 = vmatpush1.msra.mxu0 %v310
    %357 = vmatprep.subr.mxu0 %v313
    %358 = vmatpush1.msra.mxu0 %v312
    %359 = vmatprep.subr.mxu0 %v315
    %360 = vmatpush1.msra.mxu0 %v314
    %361 = vmatprep.subr.mxu0 %v317
    %362 = vmatpush1.msra.mxu0 %v316
    %363 = vmatprep.subr.mxu0 %v319
    %364 = vmatpush1.msra.mxu0 %v318
    %365 = vmatprep.subr.mxu0 %v321
    %366 = vmatpush1.msra.mxu0 %v320
    %367 = vmatprep.subr.mxu0 %v323
    %368 = vmatpush1.msra.mxu0 %v322
    %369 = vmatprep.subr.mxu0 %v325
    %370 = vmatpush1.msra.mxu0 %v324
    %371 = vmatprep.subr.mxu0 %v327
    %372 = vmatpush1.msra.mxu0 %v326
    %373 = vmatprep.subr.mxu0 %v329
    %374 = vmatpush1.msra.mxu0 %v328
    %375 = vmatprep.subr.mxu0 %v331
    %376 = vmatpush1.msra.mxu0 %v330
    %377 = vmatprep.subr.mxu0 %v333
    %378 = vmatpush1.msra.mxu0 %v332
    %379 = vmatprep.subr.mxu0 0.0
    %380 = vmatpush1.msra.mxu0 0.0
    %381 = vmatprep.subr.mxu0 0.0
    %382 = vmatpush1.msra.mxu0 0.0
    %383 = vmatprep.subr.mxu0 0.0
    %384 = vmatpush1.msra.mxu0 0.0
    %385 = vmatprep.subr.mxu0 0.0
    %386 = vmatpush1.msra.mxu0 0.0
    %387 = vmatprep.subr.mxu0 0.0
    %388 = vmatpush1.msra.mxu0 0.0
    %389 = vmatprep.subr.mxu0 0.0
    %390 = vmatpush1.msra.mxu0 0.0
    %391 = vmatprep.subr.mxu0 0.0
    %392 = vmatpush1.msra.mxu0 0.0
    %393 = vmatprep.subr.mxu0 0.0
    %394 = vmatpush1.msra.mxu0 0.0
    %395 = vmatprep.subr.mxu0 0.0
    %396 = vmatpush1.msra.mxu0 0.0
    %397 = vmatprep.subr.mxu0 0.0
    %398 = vmatpush1.msra.mxu0 0.0
    %399 = vmatprep.subr.mxu0 0.0
    %400 = vmatpush1.msra.mxu0 0.0
    %401 = vmatprep.subr.mxu0 0.0
    %402 = vmatpush1.msra.mxu0 0.0
    %403 = vmatprep.subr.mxu0 0.0
    %404 = vmatpush1.msra.mxu0 0.0
    %405 = vmatprep.subr.mxu0 0.0
    %406 = vmatpush1.msra.mxu0 0.0
    %407 = vmatprep.subr.mxu0 0.0
    %408 = vmatpush1.msra.mxu0 0.0
    %409 = vmatprep.subr.mxu0 0.0
    %410 = vmatpush1.msra.mxu0 0.0
    %411 = vmatprep.mubr.f32.mxu0 0.0
    %412 = vmatmul.mubr.f32.gmra.mrb[0].mxu0 %v301
    %v413 = vpop.f32.mrb[0].mxu0
    %v414 = vadd.f32 %v340, %v413
    %v415 = vpop.f32.mrb[0].mxu0
    %v416 = vadd.f32 %v344, %v415
    %417 = vdwg.mxu0
    %418 = vst [vmem:[#allocation10] sm:$0xff] %v414
    %419 = vst [vmem:[#allocation10 + $0x8] sm:$0xff] %v416
    // Predicated region
    $region38: #{tpu_custom_call.1} parent=1 // pred_check
      _
    $region39: #{tpu_custom_call.1} parent=1 // pred_check_branch
      %421 = sbr.rel (0) target = $region41
    $region40: #{tpu_custom_call.1} parent=1 // pred_region
      %s423 = ssub.s32 256, 256
      %424 = vsyncadd [#allocation4], %s423
      %s426 = sshll.u32 [#allocation10], 4
      %s427 = int_to_ptr.vmem [resolvable:$true] %s426
      %429 = dma.vmem_to_hbm [thread:$0]  %s427, 256, %s5, [#allocation4]
    $region41: #{tpu_custom_call.1} parent=1 // pred_fallthru
      _
    // Predicated region
    $region42: #{tpu_custom_call.1} parent=1 // pred_check
      _
    $region43: #{tpu_custom_call.1} parent=1 // pred_check_branch
      %431 = sbr.rel (0) target = $region45
    $region44: #{tpu_custom_call.1} parent=1 // pred_region
      %432 = dma.done [#allocation4], 256
    $region45: #{tpu_custom_call.1} parent=1 // pred_fallthru
      _
    %433 = vsyncpa [#allocation3], 1
    %434 = vsyncpa [#allocation6], 1
    %435 = vsyncpa [#allocation9], 1
    %436 = vsyncpa [#allocation4], 1

</llo_original>
